<compile_context>
chip_gen: v7x
topology: tpu7x:2x2x1
jax: 0.10.0
libtpu: 0.0.40
codegen_flags: <defaults>
</compile_context>

<pallas_src>
import jax
import jax.numpy as jnp
from jax import lax
from jax.experimental import pallas as pl
from jax.experimental.pallas import tpu as pltpu  # noqa: F401 (TPU backend assumed)

# Synthetic sizes (num_features / output come from data in the original script).
BATCH = 8
NUM_FEATURES = 32
OUTPUT = 8
HIDDEN = 128
LANE = 128              # hidden/output lane width (already 128-lane dense)
BN_EPS = 1e-5
NUM_LAYERS = 6          # six nn.Linear layers
BN_LAYERS = (0, 1, 3, 4)  # layers followed by BatchNorm1d (layers 2 and 5 have none)


def resnet_kernel(x_ref, w_ref, b_ref, g_ref, beta_ref, o_ref):
    """x_ref:[B,32] f32, w_ref:[6,128,128] bf16 ([in,out]), b_ref:[6,1,128] f32,
    g_ref/beta_ref:[4,1,128] f32, o_ref:[B,128] f32."""
    inv_n = 1.0 / x_ref.shape[0]  # static batch size

    def matmul(h, i):
        # bf16 MXU matmul, f32 accumulate.  No bias: callers add it only where it
        # is not cancelled by a following BatchNorm.
        return jnp.dot(h.astype(jnp.bfloat16), w_ref[i],
                       preferred_element_type=jnp.float32)

    def bn_relu(h, j):
        # Training-mode BN folded into a single affine:
        #   mu = E[h], var = E[h^2] - mu^2  (two independent reductions that overlap)
        #   scale = gamma * rsqrt(var+eps), shift = beta - mu*scale
        #   out = relu(h*scale + shift)
        mu = jnp.sum(h, axis=0, keepdims=True) * inv_n
        ex2 = jnp.sum(h * h, axis=0, keepdims=True) * inv_n
        var = ex2 - mu * mu
        scale = g_ref[j] * lax.rsqrt(var + BN_EPS)
        shift = beta_ref[j] - mu * scale
        return jnp.maximum(h * scale + shift, 0.0)

    x = x_ref[...]
    # Layer 0: Linear(32->128) -> BN -> ReLU.  Static 32-sublane weight slice; the
    # Linear bias is dropped (exactly cancelled by the BN mean subtraction).
    h = jnp.dot(x.astype(jnp.bfloat16), w_ref[0, :NUM_FEATURES, :],
                preferred_element_type=jnp.float32)
    h = bn_relu(h, 0)
    # Layer 1: Linear -> BN -> ReLU (bias dropped)
    h = bn_relu(matmul(h, 1), 1)
    # Layer 2: Linear -> ReLU (no BN -> bias kept)
    h = jnp.maximum(matmul(h, 2) + b_ref[2], 0.0)
    # Layer 3: Linear -> BN -> ReLU (bias dropped)
    h = bn_relu(matmul(h, 3), 2)
    # Layer 4: Linear -> BN -> ReLU (bias dropped)
    h = bn_relu(matmul(h, 4), 3)
    # Layer 5: final Linear (bias kept); real outputs are columns [:OUTPUT]
    o_ref[...] = matmul(h, 5) + b_ref[5]


def _full_spec(shape):
    n = len(shape)
    return pl.BlockSpec(shape, lambda *_, _n=n: (0,) * _n)


def resnet_forward(x, packed):
    w_stack, b_stack, g_stack, beta_stack = packed
    B = x.shape[0]
    out_pad = pl.pallas_call(
        resnet_kernel,
        out_shape=jax.ShapeDtypeStruct((B, LANE), jnp.float32),
        in_specs=[
            _full_spec(x.shape),
            _full_spec(w_stack.shape),
            _full_spec(b_stack.shape),
            _full_spec(g_stack.shape),
            _full_spec(beta_stack.shape),
        ],
        out_specs=_full_spec((B, LANE)),
    )(x, w_stack, b_stack, g_stack, beta_stack)
    return out_pad[:, :OUTPUT]


def init_params(key):
    """Logical (unpadded, f32) per-layer params. Linear weights stored [in, out]
    (transposed from PyTorch's [out, in]) so the kernel does h @ W on the MXU."""
    dims = [
        (NUM_FEATURES, HIDDEN),
        (HIDDEN, HIDDEN),
        (HIDDEN, HIDDEN),
        (HIDDEN, HIDDEN),
        (HIDDEN, HIDDEN),
        (HIDDEN, OUTPUT),
    ]
    layers = []
    for li, (fan_in, fan_out) in enumerate(dims):
        key, kw, kb = jax.random.split(key, 3)
        bound = float(fan_in) ** -0.5
        w = jax.random.uniform(kw, (fan_in, fan_out), jnp.float32, -bound, bound)
        b = jax.random.uniform(kb, (fan_out,), jnp.float32, -bound, bound)
        layer = {"w": w, "b": b}
        if li in BN_LAYERS:
            layer["gamma"] = jnp.ones((fan_out,), jnp.float32)
            layer["beta"] = jnp.zeros((fan_out,), jnp.float32)
        layers.append(layer)
    return layers


def pack_params(layers):
    """Pack + zero-pad the parameter arrays into 4 stacked, lane-dense arrays.
    # TODO(synk): if quantizing weights to shrink DMA further, use fp8 on v7x and
    # int8 on v5e/v6e (v7x MXU has no int path)."""
    w_stack = jnp.zeros((NUM_LAYERS, LANE, LANE), jnp.float32)
    b_stack = jnp.zeros((NUM_LAYERS, 1, LANE), jnp.float32)
    g_stack = jnp.zeros((len(BN_LAYERS), 1, LANE), jnp.float32)
    beta_stack = jnp.zeros((len(BN_LAYERS), 1, LANE), jnp.float32)
    bn_j = 0
    for i, layer in enumerate(layers):
        fi, fo = layer["w"].shape
        w_stack = w_stack.at[i, :fi, :fo].set(layer["w"])
        b_stack = b_stack.at[i, 0, :fo].set(layer["b"])
        if "gamma" in layer:
            g_stack = g_stack.at[bn_j, 0, :fo].set(layer["gamma"])
            beta_stack = beta_stack.at[bn_j, 0, :fo].set(layer["beta"])
            bn_j += 1
    # Weights live in bf16 for the MXU; VPU-side params stay f32.
    return (w_stack.astype(jnp.bfloat16), b_stack, g_stack, beta_stack)


def reference_forward(x, layers):
    """Pure-JAX reference with the original module semantics (bias everywhere,
    standard batch-variance form); dots in bf16 to match the kernel's MXU math."""
    h = x
    for i, layer in enumerate(layers):
        h = jnp.dot(h.astype(jnp.bfloat16), layer["w"].astype(jnp.bfloat16),
                    preferred_element_type=jnp.float32) + layer["b"][None, :]
        if "gamma" in layer:
            mu = jnp.mean(h, axis=0, keepdims=True)
            var = jnp.mean((h - mu) ** 2, axis=0, keepdims=True)
            h = (h - mu) * lax.rsqrt(var + BN_EPS) * layer["gamma"][None, :] \
                + layer["beta"][None, :]
        if i != NUM_LAYERS - 1:
            h = jnp.maximum(h, 0.0)
    return h


if __name__ == "__main__":
    key = jax.random.PRNGKey(0)
    kx, kp = jax.random.split(key)
    x = jax.random.normal(kx, (BATCH, NUM_FEATURES), jnp.float32)
    layers = init_params(kp)
    packed = pack_params(layers)

    out = resnet_forward(x, packed)
    out = jax.block_until_ready(out)

    ref = reference_forward(x, layers)
    assert out.shape == (BATCH, OUTPUT)
    err = float(jnp.max(jnp.abs(out - ref)))
    assert jnp.allclose(out, ref, atol=1e-2, rtol=1e-2), f"max abs err {err}"
    print("KERNEL_OK")
</pallas_src>

<mosaic_0001>
module attributes {stable_mosaic.version = 11 : i64} {
  func.func @resnet_kernel(%arg0: memref<8x32xf32, #tpu.memory_space<vmem>>, %arg1: memref<6x128x128xbf16, #tpu.memory_space<vmem>>, %arg2: memref<6x1x128xf32, #tpu.memory_space<vmem>>, %arg3: memref<4x1x128xf32, #tpu.memory_space<vmem>>, %arg4: memref<4x1x128xf32, #tpu.memory_space<vmem>>, %arg5: memref<8x128xf32, #tpu.memory_space<vmem>>) attributes {dimension_semantics = [], scalar_prefetch = 0 : i64, scratch_operands = 0 : i64, tpu.core_type = #tpu.core_type<tc>} {
    %c0 = arith.constant 0 : index
    %c0_0 = arith.constant 0 : index
    %0 = vector.load %arg0[%c0, %c0_0] : memref<8x32xf32, #tpu.memory_space<vmem>>, vector<8x32xf32>
    %1 = arith.truncf %0 : vector<8x32xf32> to vector<8x32xbf16>
    %c0_1 = arith.constant 0 : index
    %c0_2 = arith.constant 0 : index
    %c0_3 = arith.constant 0 : index
    %2 = vector.load %arg1[%c0_1, %c0_2, %c0_3] : memref<6x128x128xbf16, #tpu.memory_space<vmem>>, vector<1x32x128xbf16>
    %3 = vector.shape_cast %2 : vector<1x32x128xbf16> to vector<32x128xbf16>
    %cst = arith.constant dense<0.000000e+00> : vector<8x128xf32>
    %4 = tpu.matmul %1, %3, %cst {dimension_numbers = #tpu.dot_dimension_numbers<[1], [0], [0], [1], [0, 0, 1, 1], [], []>} : vector<8x32xbf16>, vector<32x128xbf16>, vector<8x128xf32> -> vector<8x128xf32>
    %cst_4 = arith.constant dense<0.000000e+00> : vector<128xf32>
    %5 = vector.multi_reduction <add>, %4, %cst_4 [0] : vector<8x128xf32> to vector<128xf32>
    %6 = vector.shape_cast %5 : vector<128xf32> to vector<1x128xf32>
    %cst_5 = arith.constant 1.250000e-01 : f32
    %7 = vector.broadcast %cst_5 : f32 to vector<1x128xf32>
    %8 = arith.mulf %6, %7 : vector<1x128xf32>
    %9 = arith.mulf %4, %4 : vector<8x128xf32>
    %cst_6 = arith.constant dense<0.000000e+00> : vector<128xf32>
    %10 = vector.multi_reduction <add>, %9, %cst_6 [0] : vector<8x128xf32> to vector<128xf32>
    %11 = vector.shape_cast %10 : vector<128xf32> to vector<1x128xf32>
    %cst_7 = arith.constant 1.250000e-01 : f32
    %12 = vector.broadcast %cst_7 : f32 to vector<1x128xf32>
    %13 = arith.mulf %11, %12 : vector<1x128xf32>
    %14 = arith.mulf %8, %8 : vector<1x128xf32>
    %15 = arith.subf %13, %14 : vector<1x128xf32>
    %c0_8 = arith.constant 0 : index
    %c0_9 = arith.constant 0 : index
    %c0_10 = arith.constant 0 : index
    %16 = vector.load %arg3[%c0_8, %c0_9, %c0_10] : memref<4x1x128xf32, #tpu.memory_space<vmem>>, vector<1x1x128xf32>
    %17 = vector.shape_cast %16 : vector<1x1x128xf32> to vector<1x128xf32>
    %cst_11 = arith.constant 9.99999974E-6 : f32
    %18 = vector.broadcast %cst_11 : f32 to vector<1x128xf32>
    %19 = arith.addf %15, %18 : vector<1x128xf32>
    %20 = math.rsqrt %19 : vector<1x128xf32>
    %21 = arith.mulf %17, %20 : vector<1x128xf32>
    %c0_12 = arith.constant 0 : index
    %c0_13 = arith.constant 0 : index
    %c0_14 = arith.constant 0 : index
    %22 = vector.load %arg4[%c0_12, %c0_13, %c0_14] : memref<4x1x128xf32, #tpu.memory_space<vmem>>, vector<1x1x128xf32>
    %23 = vector.shape_cast %22 : vector<1x1x128xf32> to vector<1x128xf32>
    %24 = arith.mulf %8, %21 : vector<1x128xf32>
    %25 = arith.subf %23, %24 : vector<1x128xf32>
    %26 = vector.broadcast %21 : vector<1x128xf32> to vector<8x128xf32>
    %27 = arith.mulf %4, %26 : vector<8x128xf32>
    %28 = vector.broadcast %25 : vector<1x128xf32> to vector<8x128xf32>
    %29 = arith.addf %27, %28 : vector<8x128xf32>
    %cst_15 = arith.constant 0.000000e+00 : f32
    %30 = vector.broadcast %cst_15 : f32 to vector<8x128xf32>
    %31 = arith.maximumf %29, %30 : vector<8x128xf32>
    %32 = arith.truncf %31 : vector<8x128xf32> to vector<8x128xbf16>
    %c1 = arith.constant 1 : index
    %c0_16 = arith.constant 0 : index
    %c0_17 = arith.constant 0 : index
    %33 = vector.load %arg1[%c1, %c0_16, %c0_17] : memref<6x128x128xbf16, #tpu.memory_space<vmem>>, vector<1x128x128xbf16>
    %34 = vector.shape_cast %33 : vector<1x128x128xbf16> to vector<128x128xbf16>
    %cst_18 = arith.constant dense<0.000000e+00> : vector<8x128xf32>
    %35 = tpu.matmul %32, %34, %cst_18 {dimension_numbers = #tpu.dot_dimension_numbers<[1], [0], [0], [1], [0, 0, 1, 1], [], []>} : vector<8x128xbf16>, vector<128x128xbf16>, vector<8x128xf32> -> vector<8x128xf32>
    %cst_19 = arith.constant dense<0.000000e+00> : vector<128xf32>
    %36 = vector.multi_reduction <add>, %35, %cst_19 [0] : vector<8x128xf32> to vector<128xf32>
    %37 = vector.shape_cast %36 : vector<128xf32> to vector<1x128xf32>
    %cst_20 = arith.constant 1.250000e-01 : f32
    %38 = vector.broadcast %cst_20 : f32 to vector<1x128xf32>
    %39 = arith.mulf %37, %38 : vector<1x128xf32>
    %40 = arith.mulf %35, %35 : vector<8x128xf32>
    %cst_21 = arith.constant dense<0.000000e+00> : vector<128xf32>
    %41 = vector.multi_reduction <add>, %40, %cst_21 [0] : vector<8x128xf32> to vector<128xf32>
    %42 = vector.shape_cast %41 : vector<128xf32> to vector<1x128xf32>
    %cst_22 = arith.constant 1.250000e-01 : f32
    %43 = vector.broadcast %cst_22 : f32 to vector<1x128xf32>
    %44 = arith.mulf %42, %43 : vector<1x128xf32>
    %45 = arith.mulf %39, %39 : vector<1x128xf32>
    %46 = arith.subf %44, %45 : vector<1x128xf32>
    %c1_23 = arith.constant 1 : index
    %c0_24 = arith.constant 0 : index
    %c0_25 = arith.constant 0 : index
    %47 = vector.load %arg3[%c1_23, %c0_24, %c0_25] : memref<4x1x128xf32, #tpu.memory_space<vmem>>, vector<1x1x128xf32>
    %48 = vector.shape_cast %47 : vector<1x1x128xf32> to vector<1x128xf32>
    %cst_26 = arith.constant 9.99999974E-6 : f32
    %49 = vector.broadcast %cst_26 : f32 to vector<1x128xf32>
    %50 = arith.addf %46, %49 : vector<1x128xf32>
    %51 = math.rsqrt %50 : vector<1x128xf32>
    %52 = arith.mulf %48, %51 : vector<1x128xf32>
    %c1_27 = arith.constant 1 : index
    %c0_28 = arith.constant 0 : index
    %c0_29 = arith.constant 0 : index
    %53 = vector.load %arg4[%c1_27, %c0_28, %c0_29] : memref<4x1x128xf32, #tpu.memory_space<vmem>>, vector<1x1x128xf32>
    %54 = vector.shape_cast %53 : vector<1x1x128xf32> to vector<1x128xf32>
    %55 = arith.mulf %39, %52 : vector<1x128xf32>
    %56 = arith.subf %54, %55 : vector<1x128xf32>
    %57 = vector.broadcast %52 : vector<1x128xf32> to vector<8x128xf32>
    %58 = arith.mulf %35, %57 : vector<8x128xf32>
    %59 = vector.broadcast %56 : vector<1x128xf32> to vector<8x128xf32>
    %60 = arith.addf %58, %59 : vector<8x128xf32>
    %cst_30 = arith.constant 0.000000e+00 : f32
    %61 = vector.broadcast %cst_30 : f32 to vector<8x128xf32>
    %62 = arith.maximumf %60, %61 : vector<8x128xf32>
    %63 = arith.truncf %62 : vector<8x128xf32> to vector<8x128xbf16>
    %c2 = arith.constant 2 : index
    %c0_31 = arith.constant 0 : index
    %c0_32 = arith.constant 0 : index
    %64 = vector.load %arg1[%c2, %c0_31, %c0_32] : memref<6x128x128xbf16, #tpu.memory_space<vmem>>, vector<1x128x128xbf16>
    %65 = vector.shape_cast %64 : vector<1x128x128xbf16> to vector<128x128xbf16>
    %cst_33 = arith.constant dense<0.000000e+00> : vector<8x128xf32>
    %66 = tpu.matmul %63, %65, %cst_33 {dimension_numbers = #tpu.dot_dimension_numbers<[1], [0], [0], [1], [0, 0, 1, 1], [], []>} : vector<8x128xbf16>, vector<128x128xbf16>, vector<8x128xf32> -> vector<8x128xf32>
    %c2_34 = arith.constant 2 : index
    %c0_35 = arith.constant 0 : index
    %c0_36 = arith.constant 0 : index
    %67 = vector.load %arg2[%c2_34, %c0_35, %c0_36] : memref<6x1x128xf32, #tpu.memory_space<vmem>>, vector<1x1x128xf32>
    %68 = vector.shape_cast %67 : vector<1x1x128xf32> to vector<1x128xf32>
    %69 = vector.broadcast %68 : vector<1x128xf32> to vector<8x128xf32>
    %70 = arith.addf %66, %69 : vector<8x128xf32>
    %cst_37 = arith.constant 0.000000e+00 : f32
    %71 = vector.broadcast %cst_37 : f32 to vector<8x128xf32>
    %72 = arith.maximumf %70, %71 : vector<8x128xf32>
    %73 = arith.truncf %72 : vector<8x128xf32> to vector<8x128xbf16>
    %c3 = arith.constant 3 : index
    %c0_38 = arith.constant 0 : index
    %c0_39 = arith.constant 0 : index
    %74 = vector.load %arg1[%c3, %c0_38, %c0_39] : memref<6x128x128xbf16, #tpu.memory_space<vmem>>, vector<1x128x128xbf16>
    %75 = vector.shape_cast %74 : vector<1x128x128xbf16> to vector<128x128xbf16>
    %cst_40 = arith.constant dense<0.000000e+00> : vector<8x128xf32>
    %76 = tpu.matmul %73, %75, %cst_40 {dimension_numbers = #tpu.dot_dimension_numbers<[1], [0], [0], [1], [0, 0, 1, 1], [], []>} : vector<8x128xbf16>, vector<128x128xbf16>, vector<8x128xf32> -> vector<8x128xf32>
    %cst_41 = arith.constant dense<0.000000e+00> : vector<128xf32>
    %77 = vector.multi_reduction <add>, %76, %cst_41 [0] : vector<8x128xf32> to vector<128xf32>
    %78 = vector.shape_cast %77 : vector<128xf32> to vector<1x128xf32>
    %cst_42 = arith.constant 1.250000e-01 : f32
    %79 = vector.broadcast %cst_42 : f32 to vector<1x128xf32>
    %80 = arith.mulf %78, %79 : vector<1x128xf32>
    %81 = arith.mulf %76, %76 : vector<8x128xf32>
    %cst_43 = arith.constant dense<0.000000e+00> : vector<128xf32>
    %82 = vector.multi_reduction <add>, %81, %cst_43 [0] : vector<8x128xf32> to vector<128xf32>
    %83 = vector.shape_cast %82 : vector<128xf32> to vector<1x128xf32>
    %cst_44 = arith.constant 1.250000e-01 : f32
    %84 = vector.broadcast %cst_44 : f32 to vector<1x128xf32>
    %85 = arith.mulf %83, %84 : vector<1x128xf32>
    %86 = arith.mulf %80, %80 : vector<1x128xf32>
    %87 = arith.subf %85, %86 : vector<1x128xf32>
    %c2_45 = arith.constant 2 : index
    %c0_46 = arith.constant 0 : index
    %c0_47 = arith.constant 0 : index
    %88 = vector.load %arg3[%c2_45, %c0_46, %c0_47] : memref<4x1x128xf32, #tpu.memory_space<vmem>>, vector<1x1x128xf32>
    %89 = vector.shape_cast %88 : vector<1x1x128xf32> to vector<1x128xf32>
    %cst_48 = arith.constant 9.99999974E-6 : f32
    %90 = vector.broadcast %cst_48 : f32 to vector<1x128xf32>
    %91 = arith.addf %87, %90 : vector<1x128xf32>
    %92 = math.rsqrt %91 : vector<1x128xf32>
    %93 = arith.mulf %89, %92 : vector<1x128xf32>
    %c2_49 = arith.constant 2 : index
    %c0_50 = arith.constant 0 : index
    %c0_51 = arith.constant 0 : index
    %94 = vector.load %arg4[%c2_49, %c0_50, %c0_51] : memref<4x1x128xf32, #tpu.memory_space<vmem>>, vector<1x1x128xf32>
    %95 = vector.shape_cast %94 : vector<1x1x128xf32> to vector<1x128xf32>
    %96 = arith.mulf %80, %93 : vector<1x128xf32>
    %97 = arith.subf %95, %96 : vector<1x128xf32>
    %98 = vector.broadcast %93 : vector<1x128xf32> to vector<8x128xf32>
    %99 = arith.mulf %76, %98 : vector<8x128xf32>
    %100 = vector.broadcast %97 : vector<1x128xf32> to vector<8x128xf32>
    %101 = arith.addf %99, %100 : vector<8x128xf32>
    %cst_52 = arith.constant 0.000000e+00 : f32
    %102 = vector.broadcast %cst_52 : f32 to vector<8x128xf32>
    %103 = arith.maximumf %101, %102 : vector<8x128xf32>
    %104 = arith.truncf %103 : vector<8x128xf32> to vector<8x128xbf16>
    %c4 = arith.constant 4 : index
    %c0_53 = arith.constant 0 : index
    %c0_54 = arith.constant 0 : index
    %105 = vector.load %arg1[%c4, %c0_53, %c0_54] : memref<6x128x128xbf16, #tpu.memory_space<vmem>>, vector<1x128x128xbf16>
    %106 = vector.shape_cast %105 : vector<1x128x128xbf16> to vector<128x128xbf16>
    %cst_55 = arith.constant dense<0.000000e+00> : vector<8x128xf32>
    %107 = tpu.matmul %104, %106, %cst_55 {dimension_numbers = #tpu.dot_dimension_numbers<[1], [0], [0], [1], [0, 0, 1, 1], [], []>} : vector<8x128xbf16>, vector<128x128xbf16>, vector<8x128xf32> -> vector<8x128xf32>
    %cst_56 = arith.constant dense<0.000000e+00> : vector<128xf32>
    %108 = vector.multi_reduction <add>, %107, %cst_56 [0] : vector<8x128xf32> to vector<128xf32>
    %109 = vector.shape_cast %108 : vector<128xf32> to vector<1x128xf32>
    %cst_57 = arith.constant 1.250000e-01 : f32
    %110 = vector.broadcast %cst_57 : f32 to vector<1x128xf32>
    %111 = arith.mulf %109, %110 : vector<1x128xf32>
    %112 = arith.mulf %107, %107 : vector<8x128xf32>
    %cst_58 = arith.constant dense<0.000000e+00> : vector<128xf32>
    %113 = vector.multi_reduction <add>, %112, %cst_58 [0] : vector<8x128xf32> to vector<128xf32>
    %114 = vector.shape_cast %113 : vector<128xf32> to vector<1x128xf32>
    %cst_59 = arith.constant 1.250000e-01 : f32
    %115 = vector.broadcast %cst_59 : f32 to vector<1x128xf32>
    %116 = arith.mulf %114, %115 : vector<1x128xf32>
    %117 = arith.mulf %111, %111 : vector<1x128xf32>
    %118 = arith.subf %116, %117 : vector<1x128xf32>
    %c3_60 = arith.constant 3 : index
    %c0_61 = arith.constant 0 : index
    %c0_62 = arith.constant 0 : index
    %119 = vector.load %arg3[%c3_60, %c0_61, %c0_62] : memref<4x1x128xf32, #tpu.memory_space<vmem>>, vector<1x1x128xf32>
    %120 = vector.shape_cast %119 : vector<1x1x128xf32> to vector<1x128xf32>
    %cst_63 = arith.constant 9.99999974E-6 : f32
    %121 = vector.broadcast %cst_63 : f32 to vector<1x128xf32>
    %122 = arith.addf %118, %121 : vector<1x128xf32>
    %123 = math.rsqrt %122 : vector<1x128xf32>
    %124 = arith.mulf %120, %123 : vector<1x128xf32>
    %c3_64 = arith.constant 3 : index
    %c0_65 = arith.constant 0 : index
    %c0_66 = arith.constant 0 : index
    %125 = vector.load %arg4[%c3_64, %c0_65, %c0_66] : memref<4x1x128xf32, #tpu.memory_space<vmem>>, vector<1x1x128xf32>
    %126 = vector.shape_cast %125 : vector<1x1x128xf32> to vector<1x128xf32>
    %127 = arith.mulf %111, %124 : vector<1x128xf32>
    %128 = arith.subf %126, %127 : vector<1x128xf32>
    %129 = vector.broadcast %124 : vector<1x128xf32> to vector<8x128xf32>
    %130 = arith.mulf %107, %129 : vector<8x128xf32>
    %131 = vector.broadcast %128 : vector<1x128xf32> to vector<8x128xf32>
    %132 = arith.addf %130, %131 : vector<8x128xf32>
    %cst_67 = arith.constant 0.000000e+00 : f32
    %133 = vector.broadcast %cst_67 : f32 to vector<8x128xf32>
    %134 = arith.maximumf %132, %133 : vector<8x128xf32>
    %135 = arith.truncf %134 : vector<8x128xf32> to vector<8x128xbf16>
    %c5 = arith.constant 5 : index
    %c0_68 = arith.constant 0 : index
    %c0_69 = arith.constant 0 : index
    %136 = vector.load %arg1[%c5, %c0_68, %c0_69] : memref<6x128x128xbf16, #tpu.memory_space<vmem>>, vector<1x128x128xbf16>
    %137 = vector.shape_cast %136 : vector<1x128x128xbf16> to vector<128x128xbf16>
    %cst_70 = arith.constant dense<0.000000e+00> : vector<8x128xf32>
    %138 = tpu.matmul %135, %137, %cst_70 {dimension_numbers = #tpu.dot_dimension_numbers<[1], [0], [0], [1], [0, 0, 1, 1], [], []>} : vector<8x128xbf16>, vector<128x128xbf16>, vector<8x128xf32> -> vector<8x128xf32>
    %c5_71 = arith.constant 5 : index
    %c0_72 = arith.constant 0 : index
    %c0_73 = arith.constant 0 : index
    %139 = vector.load %arg2[%c5_71, %c0_72, %c0_73] : memref<6x1x128xf32, #tpu.memory_space<vmem>>, vector<1x1x128xf32>
    %140 = vector.shape_cast %139 : vector<1x1x128xf32> to vector<1x128xf32>
    %141 = vector.broadcast %140 : vector<1x128xf32> to vector<8x128xf32>
    %142 = arith.addf %138, %141 : vector<8x128xf32>
    %c0_74 = arith.constant 0 : index
    %c0_75 = arith.constant 0 : index
    %143 = vector.load %arg5[%c0_74, %c0_75] : memref<8x128xf32, #tpu.memory_space<vmem>>, vector<8x128xf32>
    tpu.vector_store %arg5[%c0_74, %c0_75], %142 {strides = array<i32>} : memref<8x128xf32, #tpu.memory_space<vmem>>, vector<8x128xf32>,
    return
  }
}

</mosaic_0001>

<llo_original>
// kernel: tpu_custom_call.1
$region0: #{tpu_custom_call.1}
  #allocation0 [shape = 'u32[]', space=smem, size = 0x4, offset = 0x4, fixed_abs, tag = 'smem constant byte address 0x4 - core index']
  #allocation1 [shape = 'u32[144,128]{1,0:T(1,128)}', space=vmem, size = 0x12000, scoped, tag = 'internal scratch']
  %s0 = inlined_call_operand.hbm [shape: f32[8,32], index: 0, kind: input, shape index: {}]
  %s1 = inlined_call_operand.hbm [shape: bf16[6,128,128], index: 1, kind: input, shape index: {}]
  %s2 = inlined_call_operand.vmem [shape: f32[6,1,128], index: 2, kind: input, shape index: {}]
  %s3 = inlined_call_operand.vmem [shape: f32[4,1,128], index: 3, kind: input, shape index: {}]
  %s4 = inlined_call_operand.vmem [shape: f32[4,1,128], index: 4, kind: input, shape index: {}]
  %s5 = inlined_call_operand.hbm [shape: f32[8,128], index: 5, kind: output, shape index: {}]
  %s6 = sld [smem:[#allocation0]]
  $region38: #{tpu_custom_call.1} parent=0
    _
  %s8 = ssub.s32 1, %s6
  %s9 = scalar_select 0, %s8, %s6
  $region1: #{tpu_custom_call.1} parent=0
    #allocation2 [shape = 'u8[4096]{0}', space=vmem, size = 0x1000, scoped, tag = 'input window, operand 0, single buffered']
    #allocation3 [shape = 's32[1]{0}', space=sflag, size = 0x4, scoped, tag = 'scoped memory for tpu_custom_call.1']
    #allocation4 [shape = 's32[1]{0}', space=sflag, size = 0x4, scoped, tag = 'scoped memory for tpu_custom_call.1']
    #allocation5 [shape = 'u8[196608]{0}', space=vmem, size = 0x30000, scoped, tag = 'input window, operand 1, single buffered']
    #allocation6 [shape = 's32[1]{0}', space=sflag, size = 0x4, scoped, tag = 'scoped memory for tpu_custom_call.1']
    #allocation7 [shape = 'u8[4096]{0}', space=vmem, size = 0x1000, scoped, tag = 'output window, operand 0, single buffered']
    %10 = vsyncpa [#allocation3], 0
    %11 = vsyncpa [#allocation6], 0
    %12 = vsyncpa [#allocation4], 0
    // Predicated region
    $region2: #{tpu_custom_call.1} parent=1 // pred_check
      _
    $region3: #{tpu_custom_call.1} parent=1 // pred_check_branch
      %14 = sbr.rel (0) target = $region5
    $region4: #{tpu_custom_call.1} parent=1 // pred_region
      %s16 = ssub.s32 128, 128
      %17 = vsyncadd [#allocation3], %s16
      %s19 = sshll.u32 [#allocation2], 4
      %s20 = int_to_ptr.vmem [resolvable:$true] %s19
      %22 = dma.hbm_to_vmem [thread:$0]  %s0, 128, %s20, [#allocation3]
    $region5: #{tpu_custom_call.1} parent=1 // pred_fallthru
      _
    // Predicated region
    $region6: #{tpu_custom_call.1} parent=1 // pred_check
      _
    $region7: #{tpu_custom_call.1} parent=1 // pred_check_branch
      %24 = sbr.rel (0) target = $region9
    $region8: #{tpu_custom_call.1} parent=1 // pred_region
      %s26 = ssub.s32 6144, 6144
      %27 = vsyncadd [#allocation6], %s26
      %s28 = sshll.u32 [#allocation5], 4
      %s29 = int_to_ptr.vmem [resolvable:$true] %s28
      %34 = dma.hbm_to_vmem [thread:$0]  %s1, 6144, %s29, [#allocation6], 64, 64, 4
    $region9: #{tpu_custom_call.1} parent=1 // pred_fallthru
      _
    // Predicated region
    $region10: #{tpu_custom_call.1} parent=1 // pred_check
      _
    $region11: #{tpu_custom_call.1} parent=1 // pred_check_branch
      %36 = sbr.rel (0) target = $region13
    $region12: #{tpu_custom_call.1} parent=1 // pred_region
      _
    $region13: #{tpu_custom_call.1} parent=1 // pred_fallthru
      _
    // Predicated region
    $region14: #{tpu_custom_call.1} parent=1 // pred_check
      _
    $region15: #{tpu_custom_call.1} parent=1 // pred_check_branch
      %38 = sbr.rel (0) target = $region17
    $region16: #{tpu_custom_call.1} parent=1 // pred_region
      _
    $region17: #{tpu_custom_call.1} parent=1 // pred_fallthru
      _
    // Predicated region
    $region18: #{tpu_custom_call.1} parent=1 // pred_check
      _
    $region19: #{tpu_custom_call.1} parent=1 // pred_check_branch
      %40 = sbr.rel (0) target = $region21
    $region20: #{tpu_custom_call.1} parent=1 // pred_region
      _
    $region21: #{tpu_custom_call.1} parent=1 // pred_fallthru
      _
    // Predicated region
    $region22: #{tpu_custom_call.1} parent=1 // pred_check
      _
    $region23: #{tpu_custom_call.1} parent=1 // pred_check_branch
      %42 = sbr.rel (0) target = $region25
    $region24: #{tpu_custom_call.1} parent=1 // pred_region
      %43 = dma.done [#allocation3], 128
    $region25: #{tpu_custom_call.1} parent=1 // pred_fallthru
      _
    // Predicated region
    $region26: #{tpu_custom_call.1} parent=1 // pred_check
      _
    $region27: #{tpu_custom_call.1} parent=1 // pred_check_branch
      %45 = sbr.rel (0) target = $region29
    $region28: #{tpu_custom_call.1} parent=1 // pred_region
      %46 = dma.done [#allocation6], 6144
    $region29: #{tpu_custom_call.1} parent=1 // pred_fallthru
      _
    %v48 = vld [vmem:[#allocation2] sm:$0xff]
    %v49 = vpack.c.bf16 %v48, %v48
    %v50 = vld [vmem:[#allocation5] sm:$0xf]
    %v51 = vld [vmem:[#allocation5 + $0x4] sm:$0xf]
    %v52 = vld [vmem:[#allocation5 + $0x8] sm:$0xf]
    %v53 = vld [vmem:[#allocation5 + $0xc] sm:$0xf]
    %v58 = vunpack.c.l.b16 %v50
    %v59 = vunpack.c.l.b16 %v51
    %v60 = vunpack.c.l.b16 %v52
    %v61 = vunpack.c.l.b16 %v53
    %v62 = vpack.c.b16 %v59, %v58
    %v63 = vpack.c.b16 %v61, %v60
    %vm66 = vcmask 261120
    %v68 = vsel %vm66, %v49, 0
    %70 = vmatprep.subr.bf16.mxu0 0
    %71 = vmatpush1.bf16.msra.mxu0 %v62
    %72 = vmatprep.subr.bf16.mxu0 0
    %73 = vmatpush1.bf16.msra.mxu0 %v63
    %74 = vmatprep.subr.bf16.mxu0 0
    %75 = vmatpush1.bf16.msra.mxu0 0
    %76 = vmatprep.subr.bf16.mxu0 0
    %77 = vmatpush1.bf16.msra.mxu0 0
    %78 = vmatprep.subr.bf16.mxu0 0
    %79 = vmatpush1.bf16.msra.mxu0 0
    %80 = vmatprep.subr.bf16.mxu0 0
    %81 = vmatpush1.bf16.msra.mxu0 0
    %82 = vmatprep.subr.bf16.mxu0 0
    %83 = vmatpush1.bf16.msra.mxu0 0
    %84 = vmatprep.subr.bf16.mxu0 0
    %85 = vmatpush1.bf16.msra.mxu0 0
    %86 = vmatprep.subr.bf16.mxu0 0
    %87 = vmatpush1.bf16.msra.mxu0 0
    %88 = vmatprep.subr.bf16.mxu0 0
    %89 = vmatpush1.bf16.msra.mxu0 0
    %90 = vmatprep.subr.bf16.mxu0 0
    %91 = vmatpush1.bf16.msra.mxu0 0
    %92 = vmatprep.subr.bf16.mxu0 0
    %93 = vmatpush1.bf16.msra.mxu0 0
    %94 = vmatprep.subr.bf16.mxu0 0
    %95 = vmatpush1.bf16.msra.mxu0 0
    %96 = vmatprep.subr.bf16.mxu0 0
    %97 = vmatpush1.bf16.msra.mxu0 0
    %98 = vmatprep.subr.bf16.mxu0 0
    %99 = vmatpush1.bf16.msra.mxu0 0
    %100 = vmatprep.subr.bf16.mxu0 0
    %101 = vmatpush1.bf16.msra.mxu0 0
    %102 = vmatprep.mubr.bf16.mxu0 0
    %103 = vmatmul.mubr.bf16.gmra.mrb[0].mxu0 %v68
    %v104 = vpop.f32.mrb[0].mxu0
    %v105 = vadd.f32 0.0, %v104
    %v106 = vpop.f32.mrb[0].mxu0
    %v107 = vpop.f32.mrb[0].mxu0
    %v108 = vpop.f32.mrb[0].mxu0
    %109 = vdwg.mxu0
    %v110 = vrot.slane %v105, 4
    %v111 = vadd.f32 %v105, %v110
    %v112 = vrot.slane %v111, 2
    %v113 = vadd.f32 %v111, %v112
    %v114 = vrot.slane %v113, 1
    %v115 = vadd.f32 %v113, %v114
    %v116 = vmul.f32 %v115, 0.125
    %v117 = vmul.f32 %v105, %v105
    %v118 = vrot.slane %v117, 4
    %v119 = vadd.f32 %v117, %v118
    %v120 = vrot.slane %v119, 2
    %v121 = vadd.f32 %v119, %v120
    %v122 = vrot.slane %v121, 1
    %v123 = vadd.f32 %v121, %v122
    %v124 = vmul.f32 %v123, 0.125
    %v125 = vmul.f32 %v116, %v116
    %v126 = vsub.f32 %v124, %v125
    %v127 = vld [vmem:[%s3] sm:$0x1]
    %v128 = vadd.f32 %v126, 1e-05
    %v129 = vrsqrt.pop %v128
    %v130 = vmul.f32 %v127, %v129
    %v131 = vld [vmem:[%s4] sm:$0x1]
    %v132 = vmul.f32 %v116, %v130
    %v133 = vsub.f32 %v131, %v132
    %v135 = vlaneseq
    %v136 = vshrl.u32 %v135, 7
    %v137 = vsub.s32 0, %v136
    %v138 = vrot.slane %v130, %v137
    %v140 = vmul.f32 %v105, %v138
    %v142 = vlaneseq
    %v143 = vshrl.u32 %v142, 7
    %v144 = vsub.s32 0, %v143
    %v145 = vrot.slane %v133, %v144
    %v147 = vadd.f32 %v140, %v145
    %v148 = vmax.f32 %v147, 0.0
    %v149 = vpack.c.bf16 %v148, %v148
    %s150 = scalar_lea.vmem [#allocation5], 64
    %v151 = vld [vmem:[%s150] sm:$0xf]
    %v152 = vld [vmem:[%s150 + $0x4] sm:$0xf]
    %v153 = vld [vmem:[%s150 + $0x8] sm:$0xf]
    %v154 = vld [vmem:[%s150 + $0xc] sm:$0xf]
    %v155 = vld [vmem:[%s150 + $0x10] sm:$0xf]
    %v156 = vld [vmem:[%s150 + $0x14] sm:$0xf]
    %v157 = vld [vmem:[%s150 + $0x18] sm:$0xf]
    %v158 = vld [vmem:[%s150 + $0x1c] sm:$0xf]
    %v159 = vld [vmem:[%s150 + $0x20] sm:$0xf]
    %v160 = vld [vmem:[%s150 + $0x24] sm:$0xf]
    %v161 = vld [vmem:[%s150 + $0x28] sm:$0xf]
    %v162 = vld [vmem:[%s150 + $0x2c] sm:$0xf]
    %v163 = vld [vmem:[%s150 + $0x30] sm:$0xf]
    %v164 = vld [vmem:[%s150 + $0x34] sm:$0xf]
    %v165 = vld [vmem:[%s150 + $0x38] sm:$0xf]
    %v166 = vld [vmem:[%s150 + $0x3c] sm:$0xf]
    %v183 = vunpack.c.l.b16 %v151
    %v184 = vunpack.c.l.b16 %v152
    %v185 = vunpack.c.l.b16 %v153
    %v186 = vunpack.c.l.b16 %v154
    %v187 = vunpack.c.l.b16 %v155
    %v188 = vunpack.c.l.b16 %v156
    %v189 = vunpack.c.l.b16 %v157
    %v190 = vunpack.c.l.b16 %v158
    %v191 = vunpack.c.l.b16 %v159
    %v192 = vunpack.c.l.b16 %v160
    %v193 = vunpack.c.l.b16 %v161
    %v194 = vunpack.c.l.b16 %v162
    %v195 = vunpack.c.l.b16 %v163
    %v196 = vunpack.c.l.b16 %v164
    %v197 = vunpack.c.l.b16 %v165
    %v198 = vunpack.c.l.b16 %v166
    %v199 = vpack.c.b16 %v184, %v183
    %v200 = vpack.c.b16 %v186, %v185
    %v201 = vpack.c.b16 %v188, %v187
    %v202 = vpack.c.b16 %v190, %v189
    %v203 = vpack.c.b16 %v192, %v191
    %v204 = vpack.c.b16 %v194, %v193
    %v205 = vpack.c.b16 %v196, %v195
    %v206 = vpack.c.b16 %v198, %v197
    %215 = vmatprep.subr.bf16.mxu0 0
    %216 = vmatpush1.bf16.msra.mxu0 %v199
    %217 = vmatprep.subr.bf16.mxu0 0
    %218 = vmatpush1.bf16.msra.mxu0 %v200
    %219 = vmatprep.subr.bf16.mxu0 0
    %220 = vmatpush1.bf16.msra.mxu0 %v201
    %221 = vmatprep.subr.bf16.mxu0 0
    %222 = vmatpush1.bf16.msra.mxu0 %v202
    %223 = vmatprep.subr.bf16.mxu0 0
    %224 = vmatpush1.bf16.msra.mxu0 %v203
    %225 = vmatprep.subr.bf16.mxu0 0
    %226 = vmatpush1.bf16.msra.mxu0 %v204
    %227 = vmatprep.subr.bf16.mxu0 0
    %228 = vmatpush1.bf16.msra.mxu0 %v205
    %229 = vmatprep.subr.bf16.mxu0 0
    %230 = vmatpush1.bf16.msra.mxu0 %v206
    %231 = vmatprep.subr.bf16.mxu0 0
    %232 = vmatpush1.bf16.msra.mxu0 0
    %233 = vmatprep.subr.bf16.mxu0 0
    %234 = vmatpush1.bf16.msra.mxu0 0
    %235 = vmatprep.subr.bf16.mxu0 0
    %236 = vmatpush1.bf16.msra.mxu0 0
    %237 = vmatprep.subr.bf16.mxu0 0
    %238 = vmatpush1.bf16.msra.mxu0 0
    %239 = vmatprep.subr.bf16.mxu0 0
    %240 = vmatpush1.bf16.msra.mxu0 0
    %241 = vmatprep.subr.bf16.mxu0 0
    %242 = vmatpush1.bf16.msra.mxu0 0
    %243 = vmatprep.subr.bf16.mxu0 0
    %244 = vmatpush1.bf16.msra.mxu0 0
    %245 = vmatprep.subr.bf16.mxu0 0
    %246 = vmatpush1.bf16.msra.mxu0 0
    %247 = vmatprep.mubr.bf16.mxu0 0
    %248 = vmatmul.mubr.bf16.gmra.mrb[0].mxu0 %v149
    %v249 = vpop.f32.mrb[0].mxu0
    %v250 = vadd.f32 0.0, %v249
    %v251 = vpop.f32.mrb[0].mxu0
    %v252 = vpop.f32.mrb[0].mxu0
    %v253 = vpop.f32.mrb[0].mxu0
    %254 = vdwg.mxu0
    %v255 = vrot.slane %v250, 4
    %v256 = vadd.f32 %v250, %v255
    %v257 = vrot.slane %v256, 2
    %v258 = vadd.f32 %v256, %v257
    %v259 = vrot.slane %v258, 1
    %v260 = vadd.f32 %v258, %v259
    %v261 = vmul.f32 %v260, 0.125
    %v262 = vmul.f32 %v250, %v250
    %v263 = vrot.slane %v262, 4
    %v264 = vadd.f32 %v262, %v263
    %v265 = vrot.slane %v264, 2
    %v266 = vadd.f32 %v264, %v265
    %v267 = vrot.slane %v266, 1
    %v268 = vadd.f32 %v266, %v267
    %v269 = vmul.f32 %v268, 0.125
    %v270 = vmul.f32 %v261, %v261
    %v271 = vsub.f32 %v269, %v270
    %s272 = scalar_lea.vmem %s3, 1
    %v273 = vld [vmem:[%s272] sm:$0x1]
    %v274 = vadd.f32 %v271, 1e-05
    %v275 = vrsqrt.pop %v274
    %v276 = vmul.f32 %v273, %v275
    %s277 = scalar_lea.vmem %s4, 1
    %v278 = vld [vmem:[%s277] sm:$0x1]
    %v279 = vmul.f32 %v261, %v276
    %v280 = vsub.f32 %v278, %v279
    %v282 = vlaneseq
    %v283 = vshrl.u32 %v282, 7
    %v284 = vsub.s32 0, %v283
    %v285 = vrot.slane %v276, %v284
    %v287 = vmul.f32 %v250, %v285
    %v289 = vlaneseq
    %v290 = vshrl.u32 %v289, 7
    %v291 = vsub.s32 0, %v290
    %v292 = vrot.slane %v280, %v291
    %v294 = vadd.f32 %v287, %v292
    %v295 = vmax.f32 %v294, 0.0
    %v296 = vpack.c.bf16 %v295, %v295
    %s297 = scalar_lea.vmem [#allocation5], 128
    %v298 = vld [vmem:[%s297] sm:$0xf]
    %v299 = vld [vmem:[%s297 + $0x4] sm:$0xf]
    %v300 = vld [vmem:[%s297 + $0x8] sm:$0xf]
    %v301 = vld [vmem:[%s297 + $0xc] sm:$0xf]
    %v302 = vld [vmem:[%s297 + $0x10] sm:$0xf]
    %v303 = vld [vmem:[%s297 + $0x14] sm:$0xf]
    %v304 = vld [vmem:[%s297 + $0x18] sm:$0xf]
    %v305 = vld [vmem:[%s297 + $0x1c] sm:$0xf]
    %v306 = vld [vmem:[%s297 + $0x20] sm:$0xf]
    %v307 = vld [vmem:[%s297 + $0x24] sm:$0xf]
    %v308 = vld [vmem:[%s297 + $0x28] sm:$0xf]
    %v309 = vld [vmem:[%s297 + $0x2c] sm:$0xf]
    %v310 = vld [vmem:[%s297 + $0x30] sm:$0xf]
    %v311 = vld [vmem:[%s297 + $0x34] sm:$0xf]
    %v312 = vld [vmem:[%s297 + $0x38] sm:$0xf]
    %v313 = vld [vmem:[%s297 + $0x3c] sm:$0xf]
    %s314 = scalar_lea.vmem %s2, 2
    %v315 = vld [vmem:[%s314] sm:$0x1]
    %v317 = vlaneseq
    %v318 = vshrl.u32 %v317, 7
    %v319 = vsub.s32 0, %v318
    %v320 = vrot.slane %v315, %v319
    %v338 = vunpack.c.l.b16 %v298
    %v339 = vunpack.c.l.b16 %v299
    %v340 = vunpack.c.l.b16 %v300
    %v341 = vunpack.c.l.b16 %v301
    %v342 = vunpack.c.l.b16 %v302
    %v343 = vunpack.c.l.b16 %v303
    %v344 = vunpack.c.l.b16 %v304
    %v345 = vunpack.c.l.b16 %v305
    %v346 = vunpack.c.l.b16 %v306
    %v347 = vunpack.c.l.b16 %v307
    %v348 = vunpack.c.l.b16 %v308
    %v349 = vunpack.c.l.b16 %v309
    %v350 = vunpack.c.l.b16 %v310
    %v351 = vunpack.c.l.b16 %v311
    %v352 = vunpack.c.l.b16 %v312
    %v353 = vunpack.c.l.b16 %v313
    %v354 = vpack.c.b16 %v339, %v338
    %v355 = vpack.c.b16 %v341, %v340
    %v356 = vpack.c.b16 %v343, %v342
    %v357 = vpack.c.b16 %v345, %v344
    %v358 = vpack.c.b16 %v347, %v346
    %v359 = vpack.c.b16 %v349, %v348
    %v360 = vpack.c.b16 %v351, %v350
    %v361 = vpack.c.b16 %v353, %v352
    %370 = vmatprep.subr.bf16.mxu0 0
    %371 = vmatpush1.bf16.msra.mxu0 %v354
    %372 = vmatprep.subr.bf16.mxu0 0
    %373 = vmatpush1.bf16.msra.mxu0 %v355
    %374 = vmatprep.subr.bf16.mxu0 0
    %375 = vmatpush1.bf16.msra.mxu0 %v356
    %376 = vmatprep.subr.bf16.mxu0 0
    %377 = vmatpush1.bf16.msra.mxu0 %v357
    %378 = vmatprep.subr.bf16.mxu0 0
    %379 = vmatpush1.bf16.msra.mxu0 %v358
    %380 = vmatprep.subr.bf16.mxu0 0
    %381 = vmatpush1.bf16.msra.mxu0 %v359
    %382 = vmatprep.subr.bf16.mxu0 0
    %383 = vmatpush1.bf16.msra.mxu0 %v360
    %384 = vmatprep.subr.bf16.mxu0 0
    %385 = vmatpush1.bf16.msra.mxu0 %v361
    %386 = vmatprep.subr.bf16.mxu0 0
    %387 = vmatpush1.bf16.msra.mxu0 0
    %388 = vmatprep.subr.bf16.mxu0 0
    %389 = vmatpush1.bf16.msra.mxu0 0
    %390 = vmatprep.subr.bf16.mxu0 0
    %391 = vmatpush1.bf16.msra.mxu0 0
    %392 = vmatprep.subr.bf16.mxu0 0
    %393 = vmatpush1.bf16.msra.mxu0 0
    %394 = vmatprep.subr.bf16.mxu0 0
    %395 = vmatpush1.bf16.msra.mxu0 0
    %396 = vmatprep.subr.bf16.mxu0 0
    %397 = vmatpush1.bf16.msra.mxu0 0
    %398 = vmatprep.subr.bf16.mxu0 0
    %399 = vmatpush1.bf16.msra.mxu0 0
    %400 = vmatprep.subr.bf16.mxu0 0
    %401 = vmatpush1.bf16.msra.mxu0 0
    %402 = vmatprep.mubr.bf16.mxu0 0
    %403 = vmatmul.mubr.bf16.gmra.mrb[0].mxu0 %v296
    %v404 = vpop.f32.mrb[0].mxu0
    %v405 = vadd.f32 %v320, %v404
    %v406 = vpop.f32.mrb[0].mxu0
    %v407 = vpop.f32.mrb[0].mxu0
    %v408 = vpop.f32.mrb[0].mxu0
    %409 = vdwg.mxu0
    %v410 = vmax.f32 %v405, 0.0
    %v411 = vpack.c.bf16 %v410, %v410
    %s412 = scalar_lea.vmem [#allocation5], 192
    %v413 = vld [vmem:[%s412] sm:$0xf]
    %v414 = vld [vmem:[%s412 + $0x4] sm:$0xf]
    %v415 = vld [vmem:[%s412 + $0x8] sm:$0xf]
    %v416 = vld [vmem:[%s412 + $0xc] sm:$0xf]
    %v417 = vld [vmem:[%s412 + $0x10] sm:$0xf]
    %v418 = vld [vmem:[%s412 + $0x14] sm:$0xf]
    %v419 = vld [vmem:[%s412 + $0x18] sm:$0xf]
    %v420 = vld [vmem:[%s412 + $0x1c] sm:$0xf]
    %v421 = vld [vmem:[%s412 + $0x20] sm:$0xf]
    %v422 = vld [vmem:[%s412 + $0x24] sm:$0xf]
    %v423 = vld [vmem:[%s412 + $0x28] sm:$0xf]
    %v424 = vld [vmem:[%s412 + $0x2c] sm:$0xf]
    %v425 = vld [vmem:[%s412 + $0x30] sm:$0xf]
    %v426 = vld [vmem:[%s412 + $0x34] sm:$0xf]
    %v427 = vld [vmem:[%s412 + $0x38] sm:$0xf]
    %v428 = vld [vmem:[%s412 + $0x3c] sm:$0xf]
    %v445 = vunpack.c.l.b16 %v413
    %v446 = vunpack.c.l.b16 %v414
    %v447 = vunpack.c.l.b16 %v415
    %v448 = vunpack.c.l.b16 %v416
    %v449 = vunpack.c.l.b16 %v417
    %v450 = vunpack.c.l.b16 %v418
    %v451 = vunpack.c.l.b16 %v419
    %v452 = vunpack.c.l.b16 %v420
    %v453 = vunpack.c.l.b16 %v421
    %v454 = vunpack.c.l.b16 %v422
    %v455 = vunpack.c.l.b16 %v423
    %v456 = vunpack.c.l.b16 %v424
    %v457 = vunpack.c.l.b16 %v425
    %v458 = vunpack.c.l.b16 %v426
    %v459 = vunpack.c.l.b16 %v427
    %v460 = vunpack.c.l.b16 %v428
    %v461 = vpack.c.b16 %v446, %v445
    %v462 = vpack.c.b16 %v448, %v447
    %v463 = vpack.c.b16 %v450, %v449
    %v464 = vpack.c.b16 %v452, %v451
    %v465 = vpack.c.b16 %v454, %v453
    %v466 = vpack.c.b16 %v456, %v455
    %v467 = vpack.c.b16 %v458, %v457
    %v468 = vpack.c.b16 %v460, %v459
    %477 = vmatprep.subr.bf16.mxu0 0
    %478 = vmatpush1.bf16.msra.mxu0 %v461
    %479 = vmatprep.subr.bf16.mxu0 0
    %480 = vmatpush1.bf16.msra.mxu0 %v462
    %481 = vmatprep.subr.bf16.mxu0 0
    %482 = vmatpush1.bf16.msra.mxu0 %v463
    %483 = vmatprep.subr.bf16.mxu0 0
    %484 = vmatpush1.bf16.msra.mxu0 %v464
    %485 = vmatprep.subr.bf16.mxu0 0
    %486 = vmatpush1.bf16.msra.mxu0 %v465
    %487 = vmatprep.subr.bf16.mxu0 0
    %488 = vmatpush1.bf16.msra.mxu0 %v466
    %489 = vmatprep.subr.bf16.mxu0 0
    %490 = vmatpush1.bf16.msra.mxu0 %v467
    %491 = vmatprep.subr.bf16.mxu0 0
    %492 = vmatpush1.bf16.msra.mxu0 %v468
    %493 = vmatprep.subr.bf16.mxu0 0
    %494 = vmatpush1.bf16.msra.mxu0 0
    %495 = vmatprep.subr.bf16.mxu0 0
    %496 = vmatpush1.bf16.msra.mxu0 0
    %497 = vmatprep.subr.bf16.mxu0 0
    %498 = vmatpush1.bf16.msra.mxu0 0
    %499 = vmatprep.subr.bf16.mxu0 0
    %500 = vmatpush1.bf16.msra.mxu0 0
    %501 = vmatprep.subr.bf16.mxu0 0
    %502 = vmatpush1.bf16.msra.mxu0 0
    %503 = vmatprep.subr.bf16.mxu0 0
    %504 = vmatpush1.bf16.msra.mxu0 0
    %505 = vmatprep.subr.bf16.mxu0 0
    %506 = vmatpush1.bf16.msra.mxu0 0
    %507 = vmatprep.subr.bf16.mxu0 0
    %508 = vmatpush1.bf16.msra.mxu0 0
    %509 = vmatprep.mubr.bf16.mxu0 0
    %510 = vmatmul.mubr.bf16.gmra.mrb[0].mxu0 %v411
    %v511 = vpop.f32.mrb[0].mxu0
    %v512 = vadd.f32 0.0, %v511
    %v513 = vpop.f32.mrb[0].mxu0
    %v514 = vpop.f32.mrb[0].mxu0
    %v515 = vpop.f32.mrb[0].mxu0
    %516 = vdwg.mxu0
    %v517 = vrot.slane %v512, 4
    %v518 = vadd.f32 %v512, %v517
    %v519 = vrot.slane %v518, 2
    %v520 = vadd.f32 %v518, %v519
    %v521 = vrot.slane %v520, 1
    %v522 = vadd.f32 %v520, %v521
    %v523 = vmul.f32 %v522, 0.125
    %v524 = vmul.f32 %v512, %v512
    %v525 = vrot.slane %v524, 4
    %v526 = vadd.f32 %v524, %v525
    %v527 = vrot.slane %v526, 2
    %v528 = vadd.f32 %v526, %v527
    %v529 = vrot.slane %v528, 1
    %v530 = vadd.f32 %v528, %v529
    %v531 = vmul.f32 %v530, 0.125
    %v532 = vmul.f32 %v523, %v523
    %v533 = vsub.f32 %v531, %v532
    %s534 = scalar_lea.vmem %s3, 2
    %v535 = vld [vmem:[%s534] sm:$0x1]
    %v536 = vadd.f32 %v533, 1e-05
    %v537 = vrsqrt.pop %v536
    %v538 = vmul.f32 %v535, %v537
    %s539 = scalar_lea.vmem %s4, 2
    %v540 = vld [vmem:[%s539] sm:$0x1]
    %v541 = vmul.f32 %v523, %v538
    %v542 = vsub.f32 %v540, %v541
    %v544 = vlaneseq
    %v545 = vshrl.u32 %v544, 7
    %v546 = vsub.s32 0, %v545
    %v547 = vrot.slane %v538, %v546
    %v549 = vmul.f32 %v512, %v547
    %v551 = vlaneseq
    %v552 = vshrl.u32 %v551, 7
    %v553 = vsub.s32 0, %v552
    %v554 = vrot.slane %v542, %v553
    %v556 = vadd.f32 %v549, %v554
    %v557 = vmax.f32 %v556, 0.0
    %v558 = vpack.c.bf16 %v557, %v557
    %s559 = scalar_lea.vmem [#allocation5], 256
    %v560 = vld [vmem:[%s559] sm:$0xf]
    %v561 = vld [vmem:[%s559 + $0x4] sm:$0xf]
    %v562 = vld [vmem:[%s559 + $0x8] sm:$0xf]
    %v563 = vld [vmem:[%s559 + $0xc] sm:$0xf]
    %v564 = vld [vmem:[%s559 + $0x10] sm:$0xf]
    %v565 = vld [vmem:[%s559 + $0x14] sm:$0xf]
    %v566 = vld [vmem:[%s559 + $0x18] sm:$0xf]
    %v567 = vld [vmem:[%s559 + $0x1c] sm:$0xf]
    %v568 = vld [vmem:[%s559 + $0x20] sm:$0xf]
    %v569 = vld [vmem:[%s559 + $0x24] sm:$0xf]
    %v570 = vld [vmem:[%s559 + $0x28] sm:$0xf]
    %v571 = vld [vmem:[%s559 + $0x2c] sm:$0xf]
    %v572 = vld [vmem:[%s559 + $0x30] sm:$0xf]
    %v573 = vld [vmem:[%s559 + $0x34] sm:$0xf]
    %v574 = vld [vmem:[%s559 + $0x38] sm:$0xf]
    %v575 = vld [vmem:[%s559 + $0x3c] sm:$0xf]
    %v592 = vunpack.c.l.b16 %v560
    %v593 = vunpack.c.l.b16 %v561
    %v594 = vunpack.c.l.b16 %v562
    %v595 = vunpack.c.l.b16 %v563
    %v596 = vunpack.c.l.b16 %v564
    %v597 = vunpack.c.l.b16 %v565
    %v598 = vunpack.c.l.b16 %v566
    %v599 = vunpack.c.l.b16 %v567
    %v600 = vunpack.c.l.b16 %v568
    %v601 = vunpack.c.l.b16 %v569
    %v602 = vunpack.c.l.b16 %v570
    %v603 = vunpack.c.l.b16 %v571
    %v604 = vunpack.c.l.b16 %v572
    %v605 = vunpack.c.l.b16 %v573
    %v606 = vunpack.c.l.b16 %v574
    %v607 = vunpack.c.l.b16 %v575
    %v608 = vpack.c.b16 %v593, %v592
    %v609 = vpack.c.b16 %v595, %v594
    %v610 = vpack.c.b16 %v597, %v596
    %v611 = vpack.c.b16 %v599, %v598
    %v612 = vpack.c.b16 %v601, %v600
    %v613 = vpack.c.b16 %v603, %v602
    %v614 = vpack.c.b16 %v605, %v604
    %v615 = vpack.c.b16 %v607, %v606
    %624 = vmatprep.subr.bf16.mxu0 0
    %625 = vmatpush1.bf16.msra.mxu0 %v608
    %626 = vmatprep.subr.bf16.mxu0 0
    %627 = vmatpush1.bf16.msra.mxu0 %v609
    %628 = vmatprep.subr.bf16.mxu0 0
    %629 = vmatpush1.bf16.msra.mxu0 %v610
    %630 = vmatprep.subr.bf16.mxu0 0
    %631 = vmatpush1.bf16.msra.mxu0 %v611
    %632 = vmatprep.subr.bf16.mxu0 0
    %633 = vmatpush1.bf16.msra.mxu0 %v612
    %634 = vmatprep.subr.bf16.mxu0 0
    %635 = vmatpush1.bf16.msra.mxu0 %v613
    %636 = vmatprep.subr.bf16.mxu0 0
    %637 = vmatpush1.bf16.msra.mxu0 %v614
    %638 = vmatprep.subr.bf16.mxu0 0
    %639 = vmatpush1.bf16.msra.mxu0 %v615
    %640 = vmatprep.subr.bf16.mxu0 0
    %641 = vmatpush1.bf16.msra.mxu0 0
    %642 = vmatprep.subr.bf16.mxu0 0
    %643 = vmatpush1.bf16.msra.mxu0 0
    %644 = vmatprep.subr.bf16.mxu0 0
    %645 = vmatpush1.bf16.msra.mxu0 0
    %646 = vmatprep.subr.bf16.mxu0 0
    %647 = vmatpush1.bf16.msra.mxu0 0
    %648 = vmatprep.subr.bf16.mxu0 0
    %649 = vmatpush1.bf16.msra.mxu0 0
    %650 = vmatprep.subr.bf16.mxu0 0
    %651 = vmatpush1.bf16.msra.mxu0 0
    %652 = vmatprep.subr.bf16.mxu0 0
    %653 = vmatpush1.bf16.msra.mxu0 0
    %654 = vmatprep.subr.bf16.mxu0 0
    %655 = vmatpush1.bf16.msra.mxu0 0
    %656 = vmatprep.mubr.bf16.mxu0 0
    %657 = vmatmul.mubr.bf16.gmra.mrb[0].mxu0 %v558
    %v658 = vpop.f32.mrb[0].mxu0
    %v659 = vadd.f32 0.0, %v658
    %v660 = vpop.f32.mrb[0].mxu0
    %v661 = vpop.f32.mrb[0].mxu0
    %v662 = vpop.f32.mrb[0].mxu0
    %663 = vdwg.mxu0
    %v664 = vrot.slane %v659, 4
    %v665 = vadd.f32 %v659, %v664
    %v666 = vrot.slane %v665, 2
    %v667 = vadd.f32 %v665, %v666
    %v668 = vrot.slane %v667, 1
    %v669 = vadd.f32 %v667, %v668
    %v670 = vmul.f32 %v669, 0.125
    %v671 = vmul.f32 %v659, %v659
    %v672 = vrot.slane %v671, 4
    %v673 = vadd.f32 %v671, %v672
    %v674 = vrot.slane %v673, 2
    %v675 = vadd.f32 %v673, %v674
    %v676 = vrot.slane %v675, 1
    %v677 = vadd.f32 %v675, %v676
    %v678 = vmul.f32 %v677, 0.125
    %v679 = vmul.f32 %v670, %v670
    %v680 = vsub.f32 %v678, %v679
    %s681 = scalar_lea.vmem %s3, 3
    %v682 = vld [vmem:[%s681] sm:$0x1]
    %v683 = vadd.f32 %v680, 1e-05
    %v684 = vrsqrt.pop %v683
    %v685 = vmul.f32 %v682, %v684
    %s686 = scalar_lea.vmem %s4, 3
    %v687 = vld [vmem:[%s686] sm:$0x1]
    %v688 = vmul.f32 %v670, %v685
    %v689 = vsub.f32 %v687, %v688
    %v691 = vlaneseq
    %v692 = vshrl.u32 %v691, 7
    %v693 = vsub.s32 0, %v692
    %v694 = vrot.slane %v685, %v693
    %v696 = vmul.f32 %v659, %v694
    %v698 = vlaneseq
    %v699 = vshrl.u32 %v698, 7
    %v700 = vsub.s32 0, %v699
    %v701 = vrot.slane %v689, %v700
    %v703 = vadd.f32 %v696, %v701
    %v704 = vmax.f32 %v703, 0.0
    %v705 = vpack.c.bf16 %v704, %v704
    %s706 = scalar_lea.vmem [#allocation5], 320
    %v707 = vld [vmem:[%s706] sm:$0xf]
    %v708 = vld [vmem:[%s706 + $0x4] sm:$0xf]
    %v709 = vld [vmem:[%s706 + $0x8] sm:$0xf]
    %v710 = vld [vmem:[%s706 + $0xc] sm:$0xf]
    %v711 = vld [vmem:[%s706 + $0x10] sm:$0xf]
    %v712 = vld [vmem:[%s706 + $0x14] sm:$0xf]
    %v713 = vld [vmem:[%s706 + $0x18] sm:$0xf]
    %v714 = vld [vmem:[%s706 + $0x1c] sm:$0xf]
    %v715 = vld [vmem:[%s706 + $0x20] sm:$0xf]
    %v716 = vld [vmem:[%s706 + $0x24] sm:$0xf]
    %v717 = vld [vmem:[%s706 + $0x28] sm:$0xf]
    %v718 = vld [vmem:[%s706 + $0x2c] sm:$0xf]
    %v719 = vld [vmem:[%s706 + $0x30] sm:$0xf]
    %v720 = vld [vmem:[%s706 + $0x34] sm:$0xf]
    %v721 = vld [vmem:[%s706 + $0x38] sm:$0xf]
    %v722 = vld [vmem:[%s706 + $0x3c] sm:$0xf]
    %s723 = scalar_lea.vmem %s2, 5
    %v724 = vld [vmem:[%s723] sm:$0x1]
    %v726 = vlaneseq
    %v727 = vshrl.u32 %v726, 7
    %v728 = vsub.s32 0, %v727
    %v729 = vrot.slane %v724, %v728
    %v747 = vunpack.c.l.b16 %v707
    %v748 = vunpack.c.l.b16 %v708
    %v749 = vunpack.c.l.b16 %v709
    %v750 = vunpack.c.l.b16 %v710
    %v751 = vunpack.c.l.b16 %v711
    %v752 = vunpack.c.l.b16 %v712
    %v753 = vunpack.c.l.b16 %v713
    %v754 = vunpack.c.l.b16 %v714
    %v755 = vunpack.c.l.b16 %v715
    %v756 = vunpack.c.l.b16 %v716
    %v757 = vunpack.c.l.b16 %v717
    %v758 = vunpack.c.l.b16 %v718
    %v759 = vunpack.c.l.b16 %v719
    %v760 = vunpack.c.l.b16 %v720
    %v761 = vunpack.c.l.b16 %v721
    %v762 = vunpack.c.l.b16 %v722
    %v763 = vpack.c.b16 %v748, %v747
    %v764 = vpack.c.b16 %v750, %v749
    %v765 = vpack.c.b16 %v752, %v751
    %v766 = vpack.c.b16 %v754, %v753
    %v767 = vpack.c.b16 %v756, %v755
    %v768 = vpack.c.b16 %v758, %v757
    %v769 = vpack.c.b16 %v760, %v759
    %v770 = vpack.c.b16 %v762, %v761
    %779 = vmatprep.subr.bf16.mxu0 0
    %780 = vmatpush1.bf16.msra.mxu0 %v763
    %781 = vmatprep.subr.bf16.mxu0 0
    %782 = vmatpush1.bf16.msra.mxu0 %v764
    %783 = vmatprep.subr.bf16.mxu0 0
    %784 = vmatpush1.bf16.msra.mxu0 %v765
    %785 = vmatprep.subr.bf16.mxu0 0
    %786 = vmatpush1.bf16.msra.mxu0 %v766
    %787 = vmatprep.subr.bf16.mxu0 0
    %788 = vmatpush1.bf16.msra.mxu0 %v767
    %789 = vmatprep.subr.bf16.mxu0 0
    %790 = vmatpush1.bf16.msra.mxu0 %v768
    %791 = vmatprep.subr.bf16.mxu0 0
    %792 = vmatpush1.bf16.msra.mxu0 %v769
    %793 = vmatprep.subr.bf16.mxu0 0
    %794 = vmatpush1.bf16.msra.mxu0 %v770
    %795 = vmatprep.subr.bf16.mxu0 0
    %796 = vmatpush1.bf16.msra.mxu0 0
    %797 = vmatprep.subr.bf16.mxu0 0
    %798 = vmatpush1.bf16.msra.mxu0 0
    %799 = vmatprep.subr.bf16.mxu0 0
    %800 = vmatpush1.bf16.msra.mxu0 0
    %801 = vmatprep.subr.bf16.mxu0 0
    %802 = vmatpush1.bf16.msra.mxu0 0
    %803 = vmatprep.subr.bf16.mxu0 0
    %804 = vmatpush1.bf16.msra.mxu0 0
    %805 = vmatprep.subr.bf16.mxu0 0
    %806 = vmatpush1.bf16.msra.mxu0 0
    %807 = vmatprep.subr.bf16.mxu0 0
    %808 = vmatpush1.bf16.msra.mxu0 0
    %809 = vmatprep.subr.bf16.mxu0 0
    %810 = vmatpush1.bf16.msra.mxu0 0
    %811 = vmatprep.mubr.bf16.mxu0 0
    %812 = vmatmul.mubr.bf16.gmra.mrb[0].mxu0 %v705
    %v813 = vpop.f32.mrb[0].mxu0
    %v814 = vadd.f32 %v729, %v813
    %v815 = vpop.f32.mrb[0].mxu0
    %v816 = vpop.f32.mrb[0].mxu0
    %v817 = vpop.f32.mrb[0].mxu0
    %818 = vdwg.mxu0
    %819 = vst [vmem:[#allocation7] sm:$0xff] %v814
    // Predicated region
    $region30: #{tpu_custom_call.1} parent=1 // pred_check
      _
    $region31: #{tpu_custom_call.1} parent=1 // pred_check_branch
      %821 = sbr.rel (0) target = $region33
    $region32: #{tpu_custom_call.1} parent=1 // pred_region
      %s823 = ssub.s32 128, 128
      %824 = vsyncadd [#allocation4], %s823
      %s826 = sshll.u32 [#allocation7], 4
      %s827 = int_to_ptr.vmem [resolvable:$true] %s826
      %829 = dma.vmem_to_hbm [thread:$0]  %s827, 128, %s5, [#allocation4]
    $region33: #{tpu_custom_call.1} parent=1 // pred_fallthru
      _
    // Predicated region
    $region34: #{tpu_custom_call.1} parent=1 // pred_check
      _
    $region35: #{tpu_custom_call.1} parent=1 // pred_check_branch
      %831 = sbr.rel (0) target = $region37
    $region36: #{tpu_custom_call.1} parent=1 // pred_region
      %832 = dma.done [#allocation4], 128
    $region37: #{tpu_custom_call.1} parent=1 // pred_fallthru
      _
    %833 = vsyncpa [#allocation3], 1
    %834 = vsyncpa [#allocation6], 1
    %835 = vsyncpa [#allocation4], 1

</llo_original>
